<compile_context>
chip_gen: v7x
topology: tpu7x:2x2x1
jax: 0.10.0
libtpu: 0.0.40
codegen_flags: <defaults>
</compile_context>

<pallas_src>
import functools

import jax
import jax.numpy as jnp
from jax import lax
from jax.experimental import pallas as pl
from jax.experimental.pallas import tpu as pltpu


def _same_padding(k: int):
    """PyTorch Conv1d(padding='same') pad amounts (left, right) for stride=1."""
    total = k - 1
    left = total // 2
    return left, total - left


# ----------------------------------------------------------------------------
# Fused kernel: one matmul + bias + ReLU + maxpool per batch tile.
# ----------------------------------------------------------------------------
def _fused_kernel(slab_ref, w_ref, b_ref, o_ref, *, pool: int):
    """slab_ref: [1, R, b_tile*L_eff]  im2col slab for this batch tile
       w_ref:    [n_out, R]            packed conv weights (all branches)
       b_ref:    [n_out, 1]            packed biases
       o_ref:    [1, n_out, b_tile*Lo] pooled output for this batch tile
    """
    n_out = w_ref.shape[0]
    # Single MXU matmul covering every branch, tap and batch element of the tile.
    y = jnp.dot(w_ref[...], slab_ref[0], preferred_element_type=jnp.float32)
    y = jnp.maximum(y + b_ref[...], 0.0)                  # bias + ReLU (f32, VPU)
    ncols = y.shape[-1]                                   # b_tile * Lo * pool
    pooled = jnp.max(y.reshape(n_out, ncols // pool, pool), axis=-1)  # MaxPool1d
    o_ref[0] = pooled.astype(o_ref.dtype)
    # Dropout: identity in eval mode (no-op).


# ----------------------------------------------------------------------------
# Wrapper-side packing / layout plumbing.
# ----------------------------------------------------------------------------
def _pack_params(params, k_max: int):
    """Pack all branch Conv1d weights into one [n_out, 4*k_max] slab.

    Row co_g = branch*4 + co; column ci*k_max + t_global, where t_global is the
    tap offset into the k_max-padded input (so each branch's 'same' alignment is
    baked in as a zero-padded shift).
    """
    R = 4 * k_max
    left_max = (k_max - 1) // 2
    w_rows, b_rows = [], []
    for w, b in params:                      # w: [4(out), 4(in), k], b: [4]
        k = w.shape[-1]
        left_k = (k - 1) // 2
        off = left_max - left_k              # >= 0, off + k <= k_max
        wk = jnp.zeros((4, 4, k_max), jnp.float32)
        wk = wk.at[:, :, off:off + k].set(w.astype(jnp.float32))
        w_rows.append(wk.reshape(4, R))
        b_rows.append(b.astype(jnp.float32))
    w_packed = jnp.concatenate(w_rows, axis=0)                 # [n_out, R]
    b_packed = jnp.concatenate(b_rows, axis=0).reshape(-1, 1)  # [n_out, 1]
    return w_packed, b_packed


def parallel_cnn_forward(x, params, *, pool: int, b_tile=None,
                         vmem_budget_bytes=8 << 20):
    """Fused ParallelCNN forward. x: [B, 4, L]; params: list of (w [4,4,k], b [4])."""
    B, C, L = x.shape
    assert C == 4, "ParallelCNN uses Conv1d(4, 4, k)"
    Lo = L // pool
    assert Lo > 0, "sequence length must be >= pool_kernel"
    L_eff = Lo * pool                         # positions MaxPool1d actually uses

    ks = [w.shape[-1] for (w, _) in params]
    k_max = max(ks)
    left_max, right_max = _same_padding(k_max)
    R = 4 * k_max
    n_out = 4 * len(params)

    # Batch tile: as many batch elements per grid step as the VMEM budget allows
    # (double-buffered input slab).  Pass a smaller b_tile explicitly on v7x to
    # keep >= 2 parallel grid steps for its two TensorCores.
    if b_tile is None:
        per_b = R * L_eff * 4 * 2
        b_tile = int(max(1, min(B, vmem_budget_bytes // max(per_b, 1))))
    num_tiles = -(-B // b_tile)
    B_pad = num_tiles * b_tile

    # Pad once (shared by all branches): batch pad for tiling + k_max 'same' pad.
    x_pad = jnp.pad(x, ((0, B_pad - B), (0, 0), (left_max, right_max)))  # [B_pad,4,Lp]

    # im2col: rows = (channel, tap) shifted copies, columns = (batch-in-tile, pos).
    cols = jnp.stack([x_pad[:, :, t:t + L_eff] for t in range(k_max)], axis=2)
    # cols: [B_pad, 4, k_max, L_eff]
    slab = cols.reshape(num_tiles, b_tile, 4, k_max, L_eff)
    slab = slab.transpose(0, 2, 3, 1, 4).reshape(num_tiles, R, b_tile * L_eff)

    w_packed, b_packed = _pack_params(params, k_max)

    flops = 2.0 * num_tiles * n_out * R * (b_tile * L_eff)
    bytes_accessed = (slab.size * slab.dtype.itemsize
                      + w_packed.size * 4 + b_packed.size * 4
                      + num_tiles * n_out * b_tile * Lo * x.dtype.itemsize)

    kernel = functools.partial(_fused_kernel, pool=pool)
    out = pl.pallas_call(
        kernel,
        out_shape=jax.ShapeDtypeStruct((num_tiles, n_out, b_tile * Lo), x.dtype),
        grid=(num_tiles,),
        in_specs=[
            pl.BlockSpec((1, R, b_tile * L_eff), lambda i: (i, 0, 0)),
            pl.BlockSpec((n_out, R), lambda i: (0, 0)),       # resident weights
            pl.BlockSpec((n_out, 1), lambda i: (0, 0)),       # resident biases
        ],
        out_specs=pl.BlockSpec((1, n_out, b_tile * Lo), lambda i: (i, 0, 0)),
        compiler_params=pltpu.CompilerParams(
            dimension_semantics=("parallel",)),
        cost_estimate=pl.CostEstimate(flops=int(flops), transcendentals=0,
                                      bytes_accessed=int(bytes_accessed)),
    )(slab, w_packed, b_packed)

    # Wrapper-side layout plumbing back to PyTorch's [B, n_out, Lo].
    out = out.reshape(num_tiles, n_out, b_tile, Lo).transpose(0, 2, 1, 3)
    return out.reshape(B_pad, n_out, Lo)[:B]


# ----------------------------------------------------------------------------
# Params + pure-JAX reference (correctness cross-check only).
# ----------------------------------------------------------------------------
def init_params(key, para_ker):
    """Deterministic Conv1d(4, 4, k) params, PyTorch-style uniform init."""
    params = []
    for k in para_ker:
        key, kw, kb = jax.random.split(key, 3)
        bound = 1.0 / jnp.sqrt(4.0 * k)
        w = jax.random.uniform(kw, (4, 4, k), jnp.float32, -bound, bound)
        b = jax.random.uniform(kb, (4,), jnp.float32, -bound, bound)
        params.append((w, b))
    return params


def reference_forward(x, params, *, pool: int):
    outs = []
    for w, b in params:
        k = w.shape[-1]
        left, right = _same_padding(k)
        y = lax.conv_general_dilated(
            x, w, window_strides=(1,), padding=[(left, right)],
            dimension_numbers=("NCH", "OIH", "NCH"),
        ) + b[None, :, None]
        y = jnp.maximum(y, 0.0)
        B, C, L = y.shape
        Lo = L // pool
        y = jnp.max(y[:, :, : Lo * pool].reshape(B, C, Lo, pool), axis=-1)
        outs.append(y)
    return jnp.concatenate(outs, axis=1)


if __name__ == "__main__":
    key = jax.random.PRNGKey(0)

    def run_check(para_ker, pool, B, L, key):
        key, kx, kp = jax.random.split(key, 3)
        x = jax.random.uniform(kx, (B, 4, L), jnp.float32)
        params = init_params(kp, para_ker)
        out = jax.block_until_ready(parallel_cnn_forward(x, params, pool=pool))
        ref = reference_forward(x, params, pool=pool)
        assert out.shape == (B, 4 * len(para_ker), L // pool), out.shape
        assert jnp.allclose(out, ref, atol=1e-5, rtol=1e-5), "mismatch vs reference"
        return key

    # DeePromoter-style config: 3 branches -> 12 output channels.
    key = run_check([7, 5, 3], pool=6, B=2, L=48, key=key)
    # Edge cases: even kernel size + L not divisible by pool (truncating pool).
    key = run_check([8, 4, 3], pool=6, B=2, L=50, key=key)

    print("KERNEL_OK")
</pallas_src>

<mosaic_0001>
module attributes {stable_mosaic.version = 11 : i64} {
  func.func @_fused_kernel(%arg0: i32, %arg1: memref<1x28x96xf32, #tpu.memory_space<vmem>>, %arg2: memref<12x28xf32, #tpu.memory_space<vmem>>, %arg3: memref<12x1xf32, #tpu.memory_space<vmem>>, %arg4: memref<1x12x16xf32, #tpu.memory_space<vmem>>) attributes {dimension_semantics = [#tpu.dimension_semantics<parallel>], iteration_bounds = array<i64: 1>, scalar_prefetch = 0 : i64, scratch_operands = 0 : i64, tpu.core_type = #tpu.core_type<tc>, window_params = [{transform_indices = @transform_0, window_bounds = array<i64: 1, 28, 96>}, {pipeline_mode = #tpu.pipeline_mode<synchronous>, transform_indices = @transform_1, window_bounds = array<i64: 12, 28>}, {pipeline_mode = #tpu.pipeline_mode<synchronous>, transform_indices = @transform_2, window_bounds = array<i64: 12, 1>}, {transform_indices = @transform_3, window_bounds = array<i64: 1, 12, 16>}]} {
    %c0 = arith.constant 0 : index
    %c0_0 = arith.constant 0 : index
    %0 = vector.load %arg2[%c0, %c0_0] : memref<12x28xf32, #tpu.memory_space<vmem>>, vector<12x28xf32>
    %c0_1 = arith.constant 0 : index
    %c0_2 = arith.constant 0 : index
    %c0_3 = arith.constant 0 : index
    %1 = vector.load %arg1[%c0_1, %c0_2, %c0_3] : memref<1x28x96xf32, #tpu.memory_space<vmem>>, vector<1x28x96xf32>
    %2 = vector.shape_cast %1 : vector<1x28x96xf32> to vector<28x96xf32>
    %cst = arith.constant dense<0.000000e+00> : vector<12x96xf32>
    %3 = tpu.matmul %0, %2, %cst {dimension_numbers = #tpu.dot_dimension_numbers<[1], [0], [0], [1], [0, 0, 1, 1], [], []>} : vector<12x28xf32>, vector<28x96xf32>, vector<12x96xf32> -> vector<12x96xf32>
    %c0_4 = arith.constant 0 : index
    %c0_5 = arith.constant 0 : index
    %4 = vector.load %arg3[%c0_4, %c0_5] : memref<12x1xf32, #tpu.memory_space<vmem>>, vector<12x1xf32>
    %5 = vector.broadcast %4 : vector<12x1xf32> to vector<12x96xf32>
    %6 = arith.addf %3, %5 : vector<12x96xf32>
    %cst_6 = arith.constant 0.000000e+00 : f32
    %7 = vector.broadcast %cst_6 : f32 to vector<12x96xf32>
    %8 = arith.maximumf %6, %7 : vector<12x96xf32>
    %9 = vector.shape_cast %8 : vector<12x96xf32> to vector<12x16x6xf32>
    %cst_7 = arith.constant dense<0xFF800000> : vector<12x16xf32>
    %10 = vector.multi_reduction <maximumf>, %9, %cst_7 [2] : vector<12x16x6xf32> to vector<12x16xf32>
    %c0_8 = arith.constant 0 : index
    %c0_9 = arith.constant 0 : index
    %c0_10 = arith.constant 0 : index
    %11 = vector.load %arg4[%c0_8, %c0_9, %c0_10] : memref<1x12x16xf32, #tpu.memory_space<vmem>>, vector<1x12x16xf32>
    %12 = vector.shape_cast %11 : vector<1x12x16xf32> to vector<12x16xf32>
    %13 = vector.shape_cast %10 : vector<12x16xf32> to vector<1x12x16xf32>
    tpu.vector_store %arg4[%c0_8, %c0_9, %c0_10], %13 {strides = array<i32>} : memref<1x12x16xf32, #tpu.memory_space<vmem>>, vector<1x12x16xf32>,
    return
  }
  func.func @transform_0(%arg0: i32) -> (i32, i32, i32) {
    %c0_i32 = arith.constant 0 : i32
    %c0_i32_0 = arith.constant 0 : i32
    %c0_i32_1 = arith.constant 0 : i32
    return %arg0, %c0_i32, %c0_i32_0 : i32, i32, i32
  }
  func.func @transform_1(%arg0: i32) -> (i32, i32) {
    %c0_i32 = arith.constant 0 : i32
    %c0_i32_0 = arith.constant 0 : i32
    %c0_i32_1 = arith.constant 0 : i32
    return %c0_i32, %c0_i32_0 : i32, i32
  }
  func.func @transform_2(%arg0: i32) -> (i32, i32) {
    %c0_i32 = arith.constant 0 : i32
    %c0_i32_0 = arith.constant 0 : i32
    %c0_i32_1 = arith.constant 0 : i32
    return %c0_i32, %c0_i32_0 : i32, i32
  }
  func.func @transform_3(%arg0: i32) -> (i32, i32, i32) {
    %c0_i32 = arith.constant 0 : i32
    %c0_i32_0 = arith.constant 0 : i32
    %c0_i32_1 = arith.constant 0 : i32
    return %arg0, %c0_i32, %c0_i32_0 : i32, i32, i32
  }
}

</mosaic_0001>

<llo_original>
// kernel: tpu_custom_call.1
$region0: #{tpu_custom_call.1}
  #allocation0 [shape = 'u32[]', space=smem, size = 0x4, offset = 0x4, fixed_abs, tag = 'smem constant byte address 0x4 - core index']
  #allocation1 [shape = 'u32[144,128]{1,0:T(1,128)}', space=vmem, size = 0x12000, scoped, tag = 'internal scratch']
  %s0 = inlined_call_operand.vmem [shape: f32[1,28,96], index: 0, kind: input, shape index: {}]
  %s1 = inlined_call_operand.vmem [shape: f32[12,28], index: 1, kind: input, shape index: {}]
  %s2 = inlined_call_operand.vmem [shape: f32[12,1], index: 2, kind: input, shape index: {}]
  %s3 = inlined_call_operand.vmem [shape: f32[1,12,16], index: 3, kind: output, shape index: {}]
  %s4 = sld [smem:[#allocation0]]
  $region22: #{tpu_custom_call.1} parent=0
    _
  %s6 = ssub.s32 1, %s4
  %s7 = scalar_select 0, %s6, %s4
  // Predicated region
  $region2: #{tpu_custom_call.1} parent=0 // pred_check
    _
  $region3: #{tpu_custom_call.1} parent=0 // pred_check_branch
    %9 = sbr.rel (0) target = $region5
  $region4: #{tpu_custom_call.1} parent=0 // pred_region
    _
  $region5: #{tpu_custom_call.1} parent=0 // pred_fallthru
    _
  // Predicated region
  $region6: #{tpu_custom_call.1} parent=0 // pred_check
    _
  $region7: #{tpu_custom_call.1} parent=0 // pred_check_branch
    %11 = sbr.rel (0) target = $region9
  $region8: #{tpu_custom_call.1} parent=0 // pred_region
    _
  $region9: #{tpu_custom_call.1} parent=0 // pred_fallthru
    _
  // Predicated region
  $region10: #{tpu_custom_call.1} parent=0 // pred_check
    _
  $region11: #{tpu_custom_call.1} parent=0 // pred_check_branch
    %13 = sbr.rel (0) target = $region13
  $region12: #{tpu_custom_call.1} parent=0 // pred_region
    _
  $region13: #{tpu_custom_call.1} parent=0 // pred_fallthru
    _
  %v14 = vld [vmem:[%s1] sm:$0xff]
  %v15 = vld [vmem:[%s1 + $0x8] sm:$0xf]
  %v16 = vld [vmem:[%s0] sm:$0xff]
  %v17 = vld [vmem:[%s0 + $0x8] sm:$0xff]
  %v18 = vld [vmem:[%s0 + $0x10] sm:$0xff]
  %v19 = vld [vmem:[%s0 + $0x18] sm:$0xf]
  %v20 = vld [vmem:[%s2] sm:$0xff]
  %v21 = vld [vmem:[%s2 + $0x8] sm:$0xf]
  %23 = vset.pattern.permute.xlu0 0
  %24 = vperm.xlu0 %23, %v20
  %v25 = vpop.permute.xlu0 %24
  %28 = vset.pattern.permute.xlu0 0
  %29 = vperm.xlu0 %28, %v21
  %v30 = vpop.permute.xlu0 %29
  %vm32 = vcmask 228352
  %v34 = vsel %vm32, %v14, 0
  %v37 = vsel %vm32, %v15, 0
  %vm39 = vcmask 1043456
  %v41 = vsel %vm39, %v19, 0
  %43 = vmatprep.subr.mxu0 0.0
  %44 = vmatpush1.msra.mxu0 %v16
  %45 = vmatprep.subr.mxu0 0.0
  %46 = vmatpush1.msra.mxu0 %v17
  %47 = vmatprep.subr.mxu0 0.0
  %48 = vmatpush1.msra.mxu0 %v18
  %49 = vmatprep.subr.mxu0 0.0
  %50 = vmatpush1.msra.mxu0 %v41
  %51 = vmatprep.subr.mxu0 0.0
  %52 = vmatpush1.msra.mxu0 0.0
  %53 = vmatprep.subr.mxu0 0.0
  %54 = vmatpush1.msra.mxu0 0.0
  %55 = vmatprep.subr.mxu0 0.0
  %56 = vmatpush1.msra.mxu0 0.0
  %57 = vmatprep.subr.mxu0 0.0
  %58 = vmatpush1.msra.mxu0 0.0
  %59 = vmatprep.subr.mxu0 0.0
  %60 = vmatpush1.msra.mxu0 0.0
  %61 = vmatprep.subr.mxu0 0.0
  %62 = vmatpush1.msra.mxu0 0.0
  %63 = vmatprep.subr.mxu0 0.0
  %64 = vmatpush1.msra.mxu0 0.0
  %65 = vmatprep.subr.mxu0 0.0
  %66 = vmatpush1.msra.mxu0 0.0
  %67 = vmatprep.subr.mxu0 0.0
  %68 = vmatpush1.msra.mxu0 0.0
  %69 = vmatprep.subr.mxu0 0.0
  %70 = vmatpush1.msra.mxu0 0.0
  %71 = vmatprep.subr.mxu0 0.0
  %72 = vmatpush1.msra.mxu0 0.0
  %73 = vmatprep.subr.mxu0 0.0
  %74 = vmatpush1.msra.mxu0 0.0
  %75 = vmatprep.subr.mxu0 0.0
  %76 = vmatpush1.msra.mxu0 0.0
  %77 = vmatprep.subr.mxu0 0.0
  %78 = vmatpush1.msra.mxu0 0.0
  %79 = vmatprep.subr.mxu0 0.0
  %80 = vmatpush1.msra.mxu0 0.0
  %81 = vmatprep.subr.mxu0 0.0
  %82 = vmatpush1.msra.mxu0 0.0
  %83 = vmatprep.subr.mxu0 0.0
  %84 = vmatpush1.msra.mxu0 0.0
  %85 = vmatprep.subr.mxu0 0.0
  %86 = vmatpush1.msra.mxu0 0.0
  %87 = vmatprep.subr.mxu0 0.0
  %88 = vmatpush1.msra.mxu0 0.0
  %89 = vmatprep.subr.mxu0 0.0
  %90 = vmatpush1.msra.mxu0 0.0
  %91 = vmatprep.subr.mxu0 0.0
  %92 = vmatpush1.msra.mxu0 0.0
  %93 = vmatprep.subr.mxu0 0.0
  %94 = vmatpush1.msra.mxu0 0.0
  %95 = vmatprep.subr.mxu0 0.0
  %96 = vmatpush1.msra.mxu0 0.0
  %97 = vmatprep.subr.mxu0 0.0
  %98 = vmatpush1.msra.mxu0 0.0
  %99 = vmatprep.subr.mxu0 0.0
  %100 = vmatpush1.msra.mxu0 0.0
  %101 = vmatprep.subr.mxu0 0.0
  %102 = vmatpush1.msra.mxu0 0.0
  %103 = vmatprep.subr.mxu0 0.0
  %104 = vmatpush1.msra.mxu0 0.0
  %105 = vmatprep.subr.mxu0 0.0
  %106 = vmatpush1.msra.mxu0 0.0
  %107 = vmatprep.mubr.f32.mxu0 0.0
  %108 = vmatmul.mubr.f32.gmra.mrb[0].mxu0 %v34
  %v109 = vpop.f32.mrb[0].mxu0
  %v110 = vadd.f32 %v25, %v109
  %v111 = vpop.f32.mrb[0].mxu0
  %112 = vmatprep.mubr.f32.mxu0 0.0
  %113 = vmatmul.mubr.f32.gmra.mrb[0].mxu0 %v37
  %v114 = vpop.f32.mrb[0].mxu0
  %v115 = vadd.f32 %v30, %v114
  %v116 = vpop.f32.mrb[0].mxu0
  %117 = vdwg.mxu0
  %v118 = vmax.f32 %v110, 0.0
  %v119 = vmax.f32 %v115, 0.0
  %122 = vrot.lane.b32.xlu0 %v118, 122
  %v123 = vpop.permute.xlu0 %122
  %124 = vrot.lane.b32.xlu0 %v119, 122
  %v125 = vpop.permute.xlu0 %124
  %128 = vrot.lane.b32.xlu0 %v118, 116
  %v129 = vpop.permute.xlu0 %128
  %130 = vrot.lane.b32.xlu0 %v119, 116
  %v131 = vpop.permute.xlu0 %130
  %134 = vrot.lane.b32.xlu0 %v118, 110
  %v135 = vpop.permute.xlu0 %134
  %136 = vrot.lane.b32.xlu0 %v119, 110
  %v137 = vpop.permute.xlu0 %136
  %140 = vrot.lane.b32.xlu0 %v118, 104
  %v141 = vpop.permute.xlu0 %140
  %142 = vrot.lane.b32.xlu0 %v119, 104
  %v143 = vpop.permute.xlu0 %142
  %146 = vrot.lane.b32.xlu0 %v118, 98
  %v147 = vpop.permute.xlu0 %146
  %148 = vrot.lane.b32.xlu0 %v119, 98
  %v149 = vpop.permute.xlu0 %148
  %152 = vrot.lane.b32.xlu0 %v118, 92
  %v153 = vpop.permute.xlu0 %152
  %154 = vrot.lane.b32.xlu0 %v119, 92
  %v155 = vpop.permute.xlu0 %154
  %158 = vrot.lane.b32.xlu0 %v118, 86
  %v159 = vpop.permute.xlu0 %158
  %160 = vrot.lane.b32.xlu0 %v119, 86
  %v161 = vpop.permute.xlu0 %160
  %164 = vrot.lane.b32.xlu0 %v118, 80
  %v165 = vpop.permute.xlu0 %164
  %166 = vrot.lane.b32.xlu0 %v119, 80
  %v167 = vpop.permute.xlu0 %166
  %170 = vrot.lane.b32.xlu0 %v118, 74
  %v171 = vpop.permute.xlu0 %170
  %172 = vrot.lane.b32.xlu0 %v119, 74
  %v173 = vpop.permute.xlu0 %172
  %176 = vrot.lane.b32.xlu0 %v118, 68
  %v177 = vpop.permute.xlu0 %176
  %178 = vrot.lane.b32.xlu0 %v119, 68
  %v179 = vpop.permute.xlu0 %178
  %182 = vrot.lane.b32.xlu0 %v118, 62
  %v183 = vpop.permute.xlu0 %182
  %184 = vrot.lane.b32.xlu0 %v119, 62
  %v185 = vpop.permute.xlu0 %184
  %188 = vrot.lane.b32.xlu0 %v118, 56
  %v189 = vpop.permute.xlu0 %188
  %190 = vrot.lane.b32.xlu0 %v119, 56
  %v191 = vpop.permute.xlu0 %190
  %194 = vrot.lane.b32.xlu0 %v118, 50
  %v195 = vpop.permute.xlu0 %194
  %196 = vrot.lane.b32.xlu0 %v119, 50
  %v197 = vpop.permute.xlu0 %196
  %200 = vrot.lane.b32.xlu0 %v118, 44
  %v201 = vpop.permute.xlu0 %200
  %202 = vrot.lane.b32.xlu0 %v119, 44
  %v203 = vpop.permute.xlu0 %202
  %206 = vrot.lane.b32.xlu0 %v118, 38
  %v207 = vpop.permute.xlu0 %206
  %208 = vrot.lane.b32.xlu0 %v119, 38
  %v209 = vpop.permute.xlu0 %208
  %v212 = vcombine.low %v118, %v129
  %v213 = vcombine.high %v118, %v129
  %v215 = vunpack.c.l.s4 1983009808
  %v216 = vunpack.c.0.s8 %v215
  %v217 = vlaneseq
  %v218 = vshrl.u32 %v217, 7
  %v219 = vsub.s32 %v216, %v218
  %v220 = vrot.slane %v212, %v219
  %v222 = vunpack.c.l.s4 1983009808
  %v223 = vunpack.c.0.s8 %v222
  %v224 = vlaneseq
  %v225 = vshrl.u32 %v224, 7
  %v226 = vsub.s32 %v223, %v225
  %v227 = vrot.slane %v213, %v226
  %v228 = vcombine.low %v123, %v135
  %v229 = vcombine.high %v123, %v135
  %v231 = vunpack.c.l.s4 1983009808
  %v232 = vunpack.c.0.s8 %v231
  %v233 = vlaneseq
  %v234 = vshrl.u32 %v233, 7
  %v235 = vsub.s32 %v232, %v234
  %v236 = vrot.slane %v228, %v235
  %v238 = vunpack.c.l.s4 1983009808
  %v239 = vunpack.c.0.s8 %v238
  %v240 = vlaneseq
  %v241 = vshrl.u32 %v240, 7
  %v242 = vsub.s32 %v239, %v241
  %v243 = vrot.slane %v229, %v242
  %v244 = vcombine.low %v141, %v153
  %v245 = vcombine.high %v141, %v153
  %v247 = vunpack.c.l.s4 1983009808
  %v248 = vunpack.c.0.s8 %v247
  %v249 = vlaneseq
  %v250 = vshrl.u32 %v249, 7
  %v251 = vsub.s32 %v248, %v250
  %v252 = vrot.slane %v244, %v251
  %v254 = vunpack.c.l.s4 1983009808
  %v255 = vunpack.c.0.s8 %v254
  %v256 = vlaneseq
  %v257 = vshrl.u32 %v256, 7
  %v258 = vsub.s32 %v255, %v257
  %v259 = vrot.slane %v245, %v258
  %v260 = vcombine.low %v147, %v159
  %v261 = vcombine.high %v147, %v159
  %v263 = vunpack.c.l.s4 1983009808
  %v264 = vunpack.c.0.s8 %v263
  %v265 = vlaneseq
  %v266 = vshrl.u32 %v265, 7
  %v267 = vsub.s32 %v264, %v266
  %v268 = vrot.slane %v260, %v267
  %v270 = vunpack.c.l.s4 1983009808
  %v271 = vunpack.c.0.s8 %v270
  %v272 = vlaneseq
  %v273 = vshrl.u32 %v272, 7
  %v274 = vsub.s32 %v271, %v273
  %v275 = vrot.slane %v261, %v274
  %v276 = vcombine.low %v220, %v236
  %v277 = vcombine.high %v220, %v236
  %v279 = vunpack.c.l.s4 1934713408
  %v280 = vunpack.c.0.s8 %v279
  %v281 = vlaneseq
  %v282 = vshrl.u32 %v281, 7
  %v283 = vsub.s32 %v280, %v282
  %v284 = vrot.slane %v276, %v283
  %v286 = vunpack.c.l.s4 1934713408
  %v287 = vunpack.c.0.s8 %v286
  %v288 = vlaneseq
  %v289 = vshrl.u32 %v288, 7
  %v290 = vsub.s32 %v287, %v289
  %v291 = vrot.slane %v277, %v290
  %v292 = vcombine.low %v227, %v243
  %v293 = vcombine.high %v227, %v243
  %v295 = vunpack.c.l.s4 1934713408
  %v296 = vunpack.c.0.s8 %v295
  %v297 = vlaneseq
  %v298 = vshrl.u32 %v297, 7
  %v299 = vsub.s32 %v296, %v298
  %v300 = vrot.slane %v292, %v299
  %v302 = vunpack.c.l.s4 1934713408
  %v303 = vunpack.c.0.s8 %v302
  %v304 = vlaneseq
  %v305 = vshrl.u32 %v304, 7
  %v306 = vsub.s32 %v303, %v305
  %v307 = vrot.slane %v293, %v306
  %v308 = vcombine.low %v252, %v268
  %v309 = vcombine.high %v252, %v268
  %v311 = vunpack.c.l.s4 1934713408
  %v312 = vunpack.c.0.s8 %v311
  %v313 = vlaneseq
  %v314 = vshrl.u32 %v313, 7
  %v315 = vsub.s32 %v312, %v314
  %v316 = vrot.slane %v308, %v315
  %v318 = vunpack.c.l.s4 1934713408
  %v319 = vunpack.c.0.s8 %v318
  %v320 = vlaneseq
  %v321 = vshrl.u32 %v320, 7
  %v322 = vsub.s32 %v319, %v321
  %v323 = vrot.slane %v309, %v322
  %v324 = vcombine.low %v259, %v275
  %v325 = vcombine.high %v259, %v275
  %v327 = vunpack.c.l.s4 1934713408
  %v328 = vunpack.c.0.s8 %v327
  %v329 = vlaneseq
  %v330 = vshrl.u32 %v329, 7
  %v331 = vsub.s32 %v328, %v330
  %v332 = vrot.slane %v324, %v331
  %v334 = vunpack.c.l.s4 1934713408
  %v335 = vunpack.c.0.s8 %v334
  %v336 = vlaneseq
  %v337 = vshrl.u32 %v336, 7
  %v338 = vsub.s32 %v335, %v337
  %v339 = vrot.slane %v325, %v338
  %v340 = vcombine.low %v284, %v316
  %v341 = vcombine.high %v284, %v316
  %v342 = vcombine.low %v291, %v323
  %v343 = vcombine.high %v291, %v323
  %v344 = vcombine.low %v300, %v332
  %v345 = vcombine.high %v300, %v332
  %v346 = vcombine.low %v307, %v339
  %v347 = vcombine.high %v307, %v339
  %v348 = vcombine.low %v165, %v177
  %v349 = vcombine.high %v165, %v177
  %v351 = vunpack.c.l.s4 1983009808
  %v352 = vunpack.c.0.s8 %v351
  %v353 = vlaneseq
  %v354 = vshrl.u32 %v353, 7
  %v355 = vsub.s32 %v352, %v354
  %v356 = vrot.slane %v348, %v355
  %v358 = vunpack.c.l.s4 1983009808
  %v359 = vunpack.c.0.s8 %v358
  %v360 = vlaneseq
  %v361 = vshrl.u32 %v360, 7
  %v362 = vsub.s32 %v359, %v361
  %v363 = vrot.slane %v349, %v362
  %v364 = vcombine.low %v171, %v183
  %v365 = vcombine.high %v171, %v183
  %v367 = vunpack.c.l.s4 1983009808
  %v368 = vunpack.c.0.s8 %v367
  %v369 = vlaneseq
  %v370 = vshrl.u32 %v369, 7
  %v371 = vsub.s32 %v368, %v370
  %v372 = vrot.slane %v364, %v371
  %v374 = vunpack.c.l.s4 1983009808
  %v375 = vunpack.c.0.s8 %v374
  %v376 = vlaneseq
  %v377 = vshrl.u32 %v376, 7
  %v378 = vsub.s32 %v375, %v377
  %v379 = vrot.slane %v365, %v378
  %v380 = vcombine.low %v189, %v201
  %v381 = vcombine.high %v189, %v201
  %v383 = vunpack.c.l.s4 1983009808
  %v384 = vunpack.c.0.s8 %v383
  %v385 = vlaneseq
  %v386 = vshrl.u32 %v385, 7
  %v387 = vsub.s32 %v384, %v386
  %v388 = vrot.slane %v380, %v387
  %v390 = vunpack.c.l.s4 1983009808
  %v391 = vunpack.c.0.s8 %v390
  %v392 = vlaneseq
  %v393 = vshrl.u32 %v392, 7
  %v394 = vsub.s32 %v391, %v393
  %v395 = vrot.slane %v381, %v394
  %v396 = vcombine.low %v195, %v207
  %v397 = vcombine.high %v195, %v207
  %v399 = vunpack.c.l.s4 1983009808
  %v400 = vunpack.c.0.s8 %v399
  %v401 = vlaneseq
  %v402 = vshrl.u32 %v401, 7
  %v403 = vsub.s32 %v400, %v402
  %v404 = vrot.slane %v396, %v403
  %v406 = vunpack.c.l.s4 1983009808
  %v407 = vunpack.c.0.s8 %v406
  %v408 = vlaneseq
  %v409 = vshrl.u32 %v408, 7
  %v410 = vsub.s32 %v407, %v409
  %v411 = vrot.slane %v397, %v410
  %v412 = vcombine.low %v356, %v372
  %v413 = vcombine.high %v356, %v372
  %v415 = vunpack.c.l.s4 1934713408
  %v416 = vunpack.c.0.s8 %v415
  %v417 = vlaneseq
  %v418 = vshrl.u32 %v417, 7
  %v419 = vsub.s32 %v416, %v418
  %v420 = vrot.slane %v412, %v419
  %v422 = vunpack.c.l.s4 1934713408
  %v423 = vunpack.c.0.s8 %v422
  %v424 = vlaneseq
  %v425 = vshrl.u32 %v424, 7
  %v426 = vsub.s32 %v423, %v425
  %v427 = vrot.slane %v413, %v426
  %v428 = vcombine.low %v363, %v379
  %v429 = vcombine.high %v363, %v379
  %v431 = vunpack.c.l.s4 1934713408
  %v432 = vunpack.c.0.s8 %v431
  %v433 = vlaneseq
  %v434 = vshrl.u32 %v433, 7
  %v435 = vsub.s32 %v432, %v434
  %v436 = vrot.slane %v428, %v435
  %v438 = vunpack.c.l.s4 1934713408
  %v439 = vunpack.c.0.s8 %v438
  %v440 = vlaneseq
  %v441 = vshrl.u32 %v440, 7
  %v442 = vsub.s32 %v439, %v441
  %v443 = vrot.slane %v429, %v442
  %v444 = vcombine.low %v388, %v404
  %v445 = vcombine.high %v388, %v404
  %v447 = vunpack.c.l.s4 1934713408
  %v448 = vunpack.c.0.s8 %v447
  %v449 = vlaneseq
  %v450 = vshrl.u32 %v449, 7
  %v451 = vsub.s32 %v448, %v450
  %v452 = vrot.slane %v444, %v451
  %v454 = vunpack.c.l.s4 1934713408
  %v455 = vunpack.c.0.s8 %v454
  %v456 = vlaneseq
  %v457 = vshrl.u32 %v456, 7
  %v458 = vsub.s32 %v455, %v457
  %v459 = vrot.slane %v445, %v458
  %v460 = vcombine.low %v395, %v411
  %v461 = vcombine.high %v395, %v411
  %v463 = vunpack.c.l.s4 1934713408
  %v464 = vunpack.c.0.s8 %v463
  %v465 = vlaneseq
  %v466 = vshrl.u32 %v465, 7
  %v467 = vsub.s32 %v464, %v466
  %v468 = vrot.slane %v460, %v467
  %v470 = vunpack.c.l.s4 1934713408
  %v471 = vunpack.c.0.s8 %v470
  %v472 = vlaneseq
  %v473 = vshrl.u32 %v472, 7
  %v474 = vsub.s32 %v471, %v473
  %v475 = vrot.slane %v461, %v474
  %v476 = vcombine.low %v420, %v452
  %v477 = vcombine.high %v420, %v452
  %v478 = vcombine.low %v427, %v459
  %v479 = vcombine.high %v427, %v459
  %v480 = vcombine.low %v436, %v468
  %v481 = vcombine.high %v436, %v468
  %v482 = vcombine.low %v443, %v475
  %v483 = vcombine.high %v443, %v475
  %v484 = vcombine.low %v119, %v131
  %v486 = vunpack.c.l.s4 1983009808
  %v487 = vunpack.c.0.s8 %v486
  %v488 = vlaneseq
  %v489 = vshrl.u32 %v488, 7
  %v490 = vsub.s32 %v487, %v489
  %v491 = vrot.slane %v484, %v490
  %v492 = vcombine.low %v125, %v137
  %v494 = vunpack.c.l.s4 1983009808
  %v495 = vunpack.c.0.s8 %v494
  %v496 = vlaneseq
  %v497 = vshrl.u32 %v496, 7
  %v498 = vsub.s32 %v495, %v497
  %v499 = vrot.slane %v492, %v498
  %v500 = vcombine.low %v143, %v155
  %v502 = vunpack.c.l.s4 1983009808
  %v503 = vunpack.c.0.s8 %v502
  %v504 = vlaneseq
  %v505 = vshrl.u32 %v504, 7
  %v506 = vsub.s32 %v503, %v505
  %v507 = vrot.slane %v500, %v506
  %v508 = vcombine.low %v149, %v161
  %v510 = vunpack.c.l.s4 1983009808
  %v511 = vunpack.c.0.s8 %v510
  %v512 = vlaneseq
  %v513 = vshrl.u32 %v512, 7
  %v514 = vsub.s32 %v511, %v513
  %v515 = vrot.slane %v508, %v514
  %v516 = vcombine.low %v491, %v499
  %v517 = vcombine.high %v491, %v499
  %v519 = vunpack.c.l.s4 1934713408
  %v520 = vunpack.c.0.s8 %v519
  %v521 = vlaneseq
  %v522 = vshrl.u32 %v521, 7
  %v523 = vsub.s32 %v520, %v522
  %v524 = vrot.slane %v516, %v523
  %v526 = vunpack.c.l.s4 1934713408
  %v527 = vunpack.c.0.s8 %v526
  %v528 = vlaneseq
  %v529 = vshrl.u32 %v528, 7
  %v530 = vsub.s32 %v527, %v529
  %v531 = vrot.slane %v517, %v530
  %v532 = vcombine.low %v507, %v515
  %v533 = vcombine.high %v507, %v515
  %v535 = vunpack.c.l.s4 1934713408
  %v536 = vunpack.c.0.s8 %v535
  %v537 = vlaneseq
  %v538 = vshrl.u32 %v537, 7
  %v539 = vsub.s32 %v536, %v538
  %v540 = vrot.slane %v532, %v539
  %v542 = vunpack.c.l.s4 1934713408
  %v543 = vunpack.c.0.s8 %v542
  %v544 = vlaneseq
  %v545 = vshrl.u32 %v544, 7
  %v546 = vsub.s32 %v543, %v545
  %v547 = vrot.slane %v533, %v546
  %v548 = vcombine.low %v524, %v540
  %v549 = vcombine.high %v524, %v540
  %v550 = vcombine.low %v531, %v547
  %v551 = vcombine.high %v531, %v547
  %v552 = vcombine.low %v167, %v179
  %v554 = vunpack.c.l.s4 1983009808
  %v555 = vunpack.c.0.s8 %v554
  %v556 = vlaneseq
  %v557 = vshrl.u32 %v556, 7
  %v558 = vsub.s32 %v555, %v557
  %v559 = vrot.slane %v552, %v558
  %v560 = vcombine.low %v173, %v185
  %v562 = vunpack.c.l.s4 1983009808
  %v563 = vunpack.c.0.s8 %v562
  %v564 = vlaneseq
  %v565 = vshrl.u32 %v564, 7
  %v566 = vsub.s32 %v563, %v565
  %v567 = vrot.slane %v560, %v566
  %v568 = vcombine.low %v191, %v203
  %v570 = vunpack.c.l.s4 1983009808
  %v571 = vunpack.c.0.s8 %v570
  %v572 = vlaneseq
  %v573 = vshrl.u32 %v572, 7
  %v574 = vsub.s32 %v571, %v573
  %v575 = vrot.slane %v568, %v574
  %v576 = vcombine.low %v197, %v209
  %v578 = vunpack.c.l.s4 1983009808
  %v579 = vunpack.c.0.s8 %v578
  %v580 = vlaneseq
  %v581 = vshrl.u32 %v580, 7
  %v582 = vsub.s32 %v579, %v581
  %v583 = vrot.slane %v576, %v582
  %v584 = vcombine.low %v559, %v567
  %v585 = vcombine.high %v559, %v567
  %v587 = vunpack.c.l.s4 1934713408
  %v588 = vunpack.c.0.s8 %v587
  %v589 = vlaneseq
  %v590 = vshrl.u32 %v589, 7
  %v591 = vsub.s32 %v588, %v590
  %v592 = vrot.slane %v584, %v591
  %v594 = vunpack.c.l.s4 1934713408
  %v595 = vunpack.c.0.s8 %v594
  %v596 = vlaneseq
  %v597 = vshrl.u32 %v596, 7
  %v598 = vsub.s32 %v595, %v597
  %v599 = vrot.slane %v585, %v598
  %v600 = vcombine.low %v575, %v583
  %v601 = vcombine.high %v575, %v583
  %v603 = vunpack.c.l.s4 1934713408
  %v604 = vunpack.c.0.s8 %v603
  %v605 = vlaneseq
  %v606 = vshrl.u32 %v605, 7
  %v607 = vsub.s32 %v604, %v606
  %v608 = vrot.slane %v600, %v607
  %v610 = vunpack.c.l.s4 1934713408
  %v611 = vunpack.c.0.s8 %v610
  %v612 = vlaneseq
  %v613 = vshrl.u32 %v612, 7
  %v614 = vsub.s32 %v611, %v613
  %v615 = vrot.slane %v601, %v614
  %v616 = vcombine.low %v592, %v608
  %v617 = vcombine.high %v592, %v608
  %v618 = vcombine.low %v599, %v615
  %v619 = vcombine.high %v599, %v615
  %vm620 = vcmask 48128
  %v621 = vsel %vm620, %v340, -inf
  %622 = vmax.xlane.f32.xlu0 %v621
  %v623 = vpop.xlane.xlu0 %622
  %v624 = vsel %vm620, %v476, -inf
  %625 = vmax.xlane.f32.xlu0 %v624
  %v626 = vpop.xlane.xlu0 %625
  %v627 = vsel %vm620, %v341, -inf
  %628 = vmax.xlane.f32.xlu0 %v627
  %v629 = vpop.xlane.xlu0 %628
  %v630 = vsel %vm620, %v477, -inf
  %631 = vmax.xlane.f32.xlu0 %v630
  %v632 = vpop.xlane.xlu0 %631
  %v633 = vsel %vm620, %v342, -inf
  %634 = vmax.xlane.f32.xlu0 %v633
  %v635 = vpop.xlane.xlu0 %634
  %v636 = vsel %vm620, %v478, -inf
  %637 = vmax.xlane.f32.xlu0 %v636
  %v638 = vpop.xlane.xlu0 %637
  %v639 = vsel %vm620, %v343, -inf
  %640 = vmax.xlane.f32.xlu0 %v639
  %v641 = vpop.xlane.xlu0 %640
  %v642 = vsel %vm620, %v479, -inf
  %643 = vmax.xlane.f32.xlu0 %v642
  %v644 = vpop.xlane.xlu0 %643
  %v645 = vsel %vm620, %v344, -inf
  %646 = vmax.xlane.f32.xlu0 %v645
  %v647 = vpop.xlane.xlu0 %646
  %v648 = vsel %vm620, %v480, -inf
  %649 = vmax.xlane.f32.xlu0 %v648
  %v650 = vpop.xlane.xlu0 %649
  %v651 = vsel %vm620, %v345, -inf
  %652 = vmax.xlane.f32.xlu0 %v651
  %v653 = vpop.xlane.xlu0 %652
  %v654 = vsel %vm620, %v481, -inf
  %655 = vmax.xlane.f32.xlu0 %v654
  %v656 = vpop.xlane.xlu0 %655
  %v657 = vsel %vm620, %v346, -inf
  %658 = vmax.xlane.f32.xlu0 %v657
  %v659 = vpop.xlane.xlu0 %658
  %v660 = vsel %vm620, %v482, -inf
  %661 = vmax.xlane.f32.xlu0 %v660
  %v662 = vpop.xlane.xlu0 %661
  %v663 = vsel %vm620, %v347, -inf
  %664 = vmax.xlane.f32.xlu0 %v663
  %v665 = vpop.xlane.xlu0 %664
  %v666 = vsel %vm620, %v483, -inf
  %667 = vmax.xlane.f32.xlu0 %v666
  %v668 = vpop.xlane.xlu0 %667
  %v669 = vsel %vm620, %v548, -inf
  %670 = vmax.xlane.f32.xlu0 %v669
  %v671 = vpop.xlane.xlu0 %670
  %v672 = vsel %vm620, %v616, -inf
  %673 = vmax.xlane.f32.xlu0 %v672
  %v674 = vpop.xlane.xlu0 %673
  %v675 = vsel %vm620, %v549, -inf
  %676 = vmax.xlane.f32.xlu0 %v675
  %v677 = vpop.xlane.xlu0 %676
  %v678 = vsel %vm620, %v617, -inf
  %679 = vmax.xlane.f32.xlu0 %v678
  %v680 = vpop.xlane.xlu0 %679
  %v681 = vsel %vm620, %v550, -inf
  %682 = vmax.xlane.f32.xlu0 %v681
  %v683 = vpop.xlane.xlu0 %682
  %v684 = vsel %vm620, %v618, -inf
  %685 = vmax.xlane.f32.xlu0 %v684
  %v686 = vpop.xlane.xlu0 %685
  %v687 = vsel %vm620, %v551, -inf
  %688 = vmax.xlane.f32.xlu0 %v687
  %v689 = vpop.xlane.xlu0 %688
  %v690 = vsel %vm620, %v619, -inf
  %691 = vmax.xlane.f32.xlu0 %v690
  %v692 = vpop.xlane.xlu0 %691
  %v717 = vlaneseq
  %v718 = vand.u32 %v717, 127
  %v719 = vlaneseq
  %v720 = vshrl.u32 %v719, 7
  %v721 = vsub.s32 %v718, %v720
  %v722 = vrot.slane %v623, %v721
  %v723 = vadd.s32 %v718, 4294967288
  %v724 = vlaneseq
  %v725 = vshrl.u32 %v724, 7
  %v726 = vsub.s32 %v723, %v725
  %v727 = vrot.slane %v626, %v726
  %vm728 = vcmask 130112
  %v729 = vsel %vm728, %v727, %v722
  %v730 = vlaneseq
  %v731 = vshrl.u32 %v730, 7
  %v732 = vsub.s32 %v718, %v731
  %v733 = vrot.slane %v629, %v732
  %v734 = vlaneseq
  %v735 = vshrl.u32 %v734, 7
  %v736 = vsub.s32 %v723, %v735
  %v737 = vrot.slane %v632, %v736
  %v738 = vsel %vm728, %v737, %v733
  %v739 = vlaneseq
  %v740 = vshrl.u32 %v739, 7
  %v741 = vsub.s32 %v718, %v740
  %v742 = vrot.slane %v635, %v741
  %v743 = vlaneseq
  %v744 = vshrl.u32 %v743, 7
  %v745 = vsub.s32 %v723, %v744
  %v746 = vrot.slane %v638, %v745
  %v747 = vsel %vm728, %v746, %v742
  %v748 = vlaneseq
  %v749 = vshrl.u32 %v748, 7
  %v750 = vsub.s32 %v718, %v749
  %v751 = vrot.slane %v641, %v750
  %v752 = vlaneseq
  %v753 = vshrl.u32 %v752, 7
  %v754 = vsub.s32 %v723, %v753
  %v755 = vrot.slane %v644, %v754
  %v756 = vsel %vm728, %v755, %v751
  %v757 = vlaneseq
  %v758 = vshrl.u32 %v757, 7
  %v759 = vsub.s32 %v718, %v758
  %v760 = vrot.slane %v647, %v759
  %v761 = vlaneseq
  %v762 = vshrl.u32 %v761, 7
  %v763 = vsub.s32 %v723, %v762
  %v764 = vrot.slane %v650, %v763
  %v765 = vsel %vm728, %v764, %v760
  %v766 = vlaneseq
  %v767 = vshrl.u32 %v766, 7
  %v768 = vsub.s32 %v718, %v767
  %v769 = vrot.slane %v653, %v768
  %v770 = vlaneseq
  %v771 = vshrl.u32 %v770, 7
  %v772 = vsub.s32 %v723, %v771
  %v773 = vrot.slane %v656, %v772
  %v774 = vsel %vm728, %v773, %v769
  %v775 = vlaneseq
  %v776 = vshrl.u32 %v775, 7
  %v777 = vsub.s32 %v718, %v776
  %v778 = vrot.slane %v659, %v777
  %v779 = vlaneseq
  %v780 = vshrl.u32 %v779, 7
  %v781 = vsub.s32 %v723, %v780
  %v782 = vrot.slane %v662, %v781
  %v783 = vsel %vm728, %v782, %v778
  %v784 = vlaneseq
  %v785 = vshrl.u32 %v784, 7
  %v786 = vsub.s32 %v718, %v785
  %v787 = vrot.slane %v665, %v786
  %v788 = vlaneseq
  %v789 = vshrl.u32 %v788, 7
  %v790 = vsub.s32 %v723, %v789
  %v791 = vrot.slane %v668, %v790
  %v792 = vsel %vm728, %v791, %v787
  %v793 = vlaneseq
  %v794 = vshrl.u32 %v793, 7
  %v795 = vsub.s32 %v718, %v794
  %v796 = vrot.slane %v671, %v795
  %v797 = vlaneseq
  %v798 = vshrl.u32 %v797, 7
  %v799 = vsub.s32 %v723, %v798
  %v800 = vrot.slane %v674, %v799
  %v801 = vsel %vm728, %v800, %v796
  %v802 = vlaneseq
  %v803 = vshrl.u32 %v802, 7
  %v804 = vsub.s32 %v718, %v803
  %v805 = vrot.slane %v677, %v804
  %v806 = vlaneseq
  %v807 = vshrl.u32 %v806, 7
  %v808 = vsub.s32 %v723, %v807
  %v809 = vrot.slane %v680, %v808
  %v810 = vsel %vm728, %v809, %v805
  %v811 = vlaneseq
  %v812 = vshrl.u32 %v811, 7
  %v813 = vsub.s32 %v718, %v812
  %v814 = vrot.slane %v683, %v813
  %v815 = vlaneseq
  %v816 = vshrl.u32 %v815, 7
  %v817 = vsub.s32 %v723, %v816
  %v818 = vrot.slane %v686, %v817
  %v819 = vsel %vm728, %v818, %v814
  %v820 = vlaneseq
  %v821 = vshrl.u32 %v820, 7
  %v822 = vsub.s32 %v718, %v821
  %v823 = vrot.slane %v689, %v822
  %v824 = vlaneseq
  %v825 = vshrl.u32 %v824, 7
  %v826 = vsub.s32 %v723, %v825
  %v827 = vrot.slane %v692, %v826
  %v828 = vsel %vm728, %v827, %v823
  %vm829 = vcmask 1041409
  %v830 = vsel %vm829, %v738, %v729
  %vm831 = vcmask 1042434
  %v832 = vsel %vm831, %v747, %v830
  %vm833 = vcmask 1043459
  %v834 = vsel %vm833, %v756, %v832
  %vm835 = vcmask 1044484
  %v836 = vsel %vm835, %v765, %v834
  %vm837 = vcmask 1045509
  %v838 = vsel %vm837, %v774, %v836
  %vm839 = vcmask 1046534
  %v840 = vsel %vm839, %v783, %v838
  %vm841 = vcmask 1047559
  %v842 = vsel %vm841, %v792, %v840
  %v843 = vsel %vm829, %v810, %v801
  %v844 = vsel %vm831, %v819, %v843
  %v845 = vsel %vm833, %v828, %v844
  %vm848 = vcmask 130048
  %849 = vst.msk [vmem:[%s3] sm:$0xff] %vm848, %v842
  %vm850 = vcmask 125952
  %851 = vst.msk [vmem:[%s3 + $0x8] sm:$0xf] %vm850, %v845
  // Predicated region
  $region14: #{tpu_custom_call.1} parent=0 // pred_check
    _
  $region15: #{tpu_custom_call.1} parent=0 // pred_check_branch
    %853 = sbr.rel (0) target = $region17
  $region16: #{tpu_custom_call.1} parent=0 // pred_region
    _
  $region17: #{tpu_custom_call.1} parent=0 // pred_fallthru
    _
  // Predicated region
  $region18: #{tpu_custom_call.1} parent=0 // pred_check
    _
  $region19: #{tpu_custom_call.1} parent=0 // pred_check_branch
    %855 = sbr.rel (0) target = $region21
  $region20: #{tpu_custom_call.1} parent=0 // pred_region
    _
  $region21: #{tpu_custom_call.1} parent=0 // pred_fallthru
    _

</llo_original>
